<compile_context>
chip_gen: v7x
topology: tpu7x:2x2x1
jax: 0.10.0
libtpu: 0.0.40
codegen_flags: <defaults>
</compile_context>

<pallas_src>
import functools

import jax
import jax.numpy as jnp
import numpy as np
from jax import lax
from jax.experimental import pallas as pl
from jax.experimental.pallas import tpu as pltpu


def _round_up(a, b):
    return (a + b - 1) // b * b


def _vmem_capacity_bytes():
    """Physical VMEM of the local chip; conservative 64 MiB (v7x) fallback."""
    try:
        return int(pltpu.get_tpu_info().vmem_capacity_bytes)
    except Exception:
        return 64 << 20


def _generator_kernel(x_ref, w_ref, o_ref, m_ref, l_ref, *, tv, vocab, need_mask):
    # x_ref: (tm, H) bf16 pooled activation (resident across phase & vocab)
    # w_ref: (H, tv) bf16 weight tile        o_ref: (tm, tv) log-prob tile
    # m_ref/l_ref: (tm, 1) f32 running max / running sum-exp.
    phase = pl.program_id(1)
    jv = pl.program_id(2)
    nv = pl.num_programs(2)

    @pl.when((phase == 0) & (jv == 0))
    def _init():
        m_ref[...] = jnp.full(m_ref.shape, -jnp.inf, m_ref.dtype)
        l_ref[...] = jnp.zeros(l_ref.shape, l_ref.dtype)

    # (tm, tv) logits tile on the MXU: bf16 operands, f32 accumulation.
    logits = jnp.dot(x_ref[...], w_ref[...], preferred_element_type=jnp.float32)

    @pl.when(phase == 0)
    def _accumulate_lse():
        if need_mask:
            # Only the last vocab tile has clipped (garbage) weight columns;
            # the where is an all-true no-op on the other tiles.
            col = jv * tv + lax.broadcasted_iota(jnp.int32, logits.shape, 1)
            stats = jnp.where(col < vocab, logits, -jnp.inf)
        else:
            stats = logits
        m_prev = m_ref[...]
        m_new = jnp.maximum(m_prev, jnp.max(stats, axis=-1, keepdims=True))
        l_ref[...] = (l_ref[...] * jnp.exp(m_prev - m_new)
                      + jnp.sum(jnp.exp(stats - m_new), axis=-1, keepdims=True))
        m_ref[...] = m_new

    @pl.when((phase == 0) & (jv == nv - 1))
    def _fold_lse():
        # Fold sum into max so phase 1 reads the final logsumexp from m_ref.
        m_ref[...] = m_ref[...] + jnp.log(l_ref[...])

    @pl.when(phase == 1)
    def _write():
        # Out-of-range rows/columns of edge blocks are clipped by Pallas on
        # writeback, so no explicit masking is needed here.
        o_ref[...] = (logits - m_ref[...]).astype(o_ref.dtype)


def prepare_weight(w, compute_dtype=jnp.bfloat16):
    """One-time conversion of the nn.Linear weight (vocab, hidden) into the
    kernel layout (hidden, vocab) in the MXU compute dtype.  Do this once per
    weight, outside the hot loop."""
    return jnp.asarray(w).T.astype(compute_dtype)


def generator_forward(x, w_hv, *, pool_size=2, tm=None, tv=None,
                      out_dtype=jnp.bfloat16):
    """x: (B, S, hidden*pool) f32.  w_hv: (hidden, vocab) from prepare_weight().
    Returns (B, S, vocab) log-probabilities in out_dtype."""
    B, S, feat = x.shape
    H, V = w_hv.shape
    if pool_size > 1:
        assert feat % pool_size == 0, "last dim not divisible by pool_size"
        assert feat // pool_size == H, "hidden size mismatch"
    else:
        assert feat == H
    compute_dtype = w_hv.dtype
    M = B * S

    # Maxout + cast fused into one wrapper-side XLA pass (no in-kernel maxout,
    # no pool axis in the DMA'd activation, no explicit row padding).
    if pool_size > 1:
        xm = jnp.max(x.reshape(M, H, pool_size), axis=-1)
    else:
        xm = x.reshape(M, H)
    xm = xm.astype(compute_dtype)

    # ---- Tile sizes -------------------------------------------------------
    # Row tile: large for weight reuse (weights are streamed 2*(M/tm) times).
    if tm is None:
        tm = 512
    tm = max(8, _round_up(min(tm, _round_up(M, 8)), 8))
    # Vocab tile: large enough to amortize the ~0.35us per-grid-step overhead.
    if tv is None:
        tv = 1024
    tv = max(128, _round_up(tv, 128))
    tv = min(tv, _round_up(V, 128))

    w_isz = jnp.dtype(compute_dtype).itemsize
    o_isz = jnp.dtype(out_dtype).itemsize
    cap = _vmem_capacity_bytes()
    budget = int(cap * 0.80)

    def vmem_bytes(tm_, tv_):
        return (2 * tm_ * H * w_isz          # activation block (double-buffered)
                + 2 * H * tv_ * w_isz        # weight block
                + 2 * tm_ * tv_ * o_isz      # output block
                + 2 * tm_ * 128 * 4)         # m/l scratch (lane-padded)

    # Fit the plan into the generation's VMEM: shrink tv first, then tm.
    while vmem_bytes(tm, tv) > budget and tv > 128:
        tv = max(128, tv // 2)
    while vmem_bytes(tm, tv) > budget and tm > 8:
        tm = max(8, _round_up(tm // 2, 8))

    nm = pl.cdiv(M, tm)
    nv = pl.cdiv(V, tv)
    need_mask = (nv * tv != V)

    vmem_limit = int(min(max(vmem_bytes(tm, tv) * 3 // 2, 32 << 20),
                         int(cap * 0.9)))

    kernel = functools.partial(_generator_kernel, tv=tv, vocab=V,
                               need_mask=need_mask)

    out = pl.pallas_call(
        kernel,
        out_shape=jax.ShapeDtypeStruct((M, V), out_dtype),
        grid_spec=pltpu.PrefetchScalarGridSpec(
            num_scalar_prefetch=0,
            grid=(nm, 2, nv),
            in_specs=[
                # Pooled activation row tile: constant over (phase, vocab)
                # -> fetched once per row tile, resident in VMEM.
                pl.BlockSpec((tm, H), lambda i, p, j: (i, 0)),
                # Weight vocab tile: streamed along the last axis, twice per
                # row tile (once for the lse pass, once for the write pass).
                pl.BlockSpec((H, tv), lambda i, p, j: (0, j)),
            ],
            # Per-tile output block (VMEM independent of vocab size).  During
            # phase 0 the block index is pinned at (i, 0) and never written,
            # so nothing is flushed; phase 1 writes each (i, j) tile once.
            out_specs=pl.BlockSpec((tm, tv), lambda i, p, j: (i, j * p)),
            scratch_shapes=[
                pltpu.VMEM((tm, 1), jnp.float32),   # running max -> lse
                pltpu.VMEM((tm, 1), jnp.float32),   # running sum-exp
            ]),
        compiler_params=pltpu.CompilerParams(
            dimension_semantics=("parallel", "arbitrary", "arbitrary"),
            vmem_limit_bytes=vmem_limit),
    )(xm, w_hv)

    return out.reshape(B, S, V)


def generator_reference(x, w, *, pool_size=2):
    """Pure-JAX reference matching the PyTorch module semantics (f32)."""
    if pool_size > 1:
        x = jnp.max(x.reshape(*x.shape[:-1], x.shape[-1] // pool_size, pool_size),
                    axis=-1)
    logits = x @ w.T
    return jax.nn.log_softmax(logits, axis=-1)


if __name__ == "__main__":
    pool = 2

    # Test 1: Generator(hidden_size=32, vocab_size=128); default bf16 log-probs.
    B, S, hidden, vocab = 2, 8, 32, 128
    kx, kw = jax.random.split(jax.random.PRNGKey(0))
    x = jax.random.normal(kx, (B, S, hidden * pool), dtype=jnp.float32)
    w = (jax.random.uniform(kw, (vocab, hidden), dtype=jnp.float32) - 0.5) \
        * (2.0 / np.sqrt(hidden))

    out = jax.block_until_ready(generator_forward(x, prepare_weight(w),
                                                  pool_size=pool))
    ref = generator_reference(x, w, pool_size=pool)
    np.testing.assert_allclose(np.asarray(out, dtype=np.float32),
                               np.asarray(ref), rtol=5e-2, atol=1e-1)

    # Test 2: partial row tile, multi vocab tile, masked vocab tail, f32 output.
    B2, S2, hidden2, vocab2 = 4, 100, 64, 200
    kx2, kw2 = jax.random.split(jax.random.PRNGKey(1))
    x2 = jax.random.normal(kx2, (B2, S2, hidden2 * pool), dtype=jnp.float32)
    w2 = (jax.random.uniform(kw2, (vocab2, hidden2), dtype=jnp.float32) - 0.5) \
        * (2.0 / np.sqrt(hidden2))

    out2 = jax.block_until_ready(
        generator_forward(x2, prepare_weight(w2), pool_size=pool,
                          tm=128, tv=128, out_dtype=jnp.float32))
    ref2 = generator_reference(x2, w2, pool_size=pool)
    np.testing.assert_allclose(np.asarray(out2), np.asarray(ref2),
                               rtol=2e-2, atol=2e-2)

    print("KERNEL_OK")
</pallas_src>

<mosaic_0001>
module attributes {stable_mosaic.version = 11 : i64} {
  func.func @_generator_kernel(%arg0: i32, %arg1: i32, %arg2: i32, %arg3: memref<16x32xbf16, #tpu.memory_space<vmem>>, %arg4: memref<32x128xbf16, #tpu.memory_space<vmem>>, %arg5: memref<16x128xbf16, #tpu.memory_space<vmem>>, %arg6: memref<16x1xf32, #tpu.memory_space<vmem>>, %arg7: memref<16x1xf32, #tpu.memory_space<vmem>>) attributes {dimension_semantics = [#tpu.dimension_semantics<parallel>, #tpu.dimension_semantics<arbitrary>, #tpu.dimension_semantics<arbitrary>], iteration_bounds = array<i64: 1, 2, 1>, scalar_prefetch = 0 : i64, scratch_operands = 2 : i64, tpu.core_type = #tpu.core_type<tc>, window_params = [{transform_indices = @transform_0, window_bounds = array<i64: 16, 32>}, {transform_indices = @transform_1, window_bounds = array<i64: 32, 128>}, {transform_indices = @transform_2, window_bounds = array<i64: 16, 128>}]} {
    %c0_i32 = arith.constant 0 : i32
    %0 = arith.cmpi eq, %arg1, %c0_i32 : i32
    %c0_i32_0 = arith.constant 0 : i32
    %1 = arith.cmpi eq, %arg2, %c0_i32_0 : i32
    %2 = arith.andi %0, %1 : i1
    %3 = arith.extui %2 : i1 to i32
    %c0_i32_1 = arith.constant 0 : i32
    %4 = arith.cmpi ne, %3, %c0_i32_1 : i32
    scf.if %4 {
      %cst_11 = arith.constant 0xFF800000 : f32
      %19 = vector.broadcast %cst_11 : f32 to vector<16x1xf32>
      %c0_12 = arith.constant 0 : index
      %c0_13 = arith.constant 0 : index
      %20 = vector.load %arg6[%c0_12, %c0_13] : memref<16x1xf32, #tpu.memory_space<vmem>>, vector<16x1xf32>
      tpu.vector_store %arg6[%c0_12, %c0_13], %19 {strides = array<i32>} : memref<16x1xf32, #tpu.memory_space<vmem>>, vector<16x1xf32>,
      %cst_14 = arith.constant 0.000000e+00 : f32
      %21 = vector.broadcast %cst_14 : f32 to vector<16x1xf32>
      %c0_15 = arith.constant 0 : index
      %c0_16 = arith.constant 0 : index
      %22 = vector.load %arg7[%c0_15, %c0_16] : memref<16x1xf32, #tpu.memory_space<vmem>>, vector<16x1xf32>
      tpu.vector_store %arg7[%c0_15, %c0_16], %21 {strides = array<i32>} : memref<16x1xf32, #tpu.memory_space<vmem>>, vector<16x1xf32>,
    } else {
    }
    %c0 = arith.constant 0 : index
    %c0_2 = arith.constant 0 : index
    %5 = vector.load %arg3[%c0, %c0_2] : memref<16x32xbf16, #tpu.memory_space<vmem>>, vector<16x32xbf16>
    %c0_3 = arith.constant 0 : index
    %c0_4 = arith.constant 0 : index
    %6 = vector.load %arg4[%c0_3, %c0_4] : memref<32x128xbf16, #tpu.memory_space<vmem>>, vector<32x128xbf16>
    %cst = arith.constant dense<0.000000e+00> : vector<16x128xf32>
    %7 = tpu.matmul %5, %6, %cst {dimension_numbers = #tpu.dot_dimension_numbers<[1], [0], [0], [1], [0, 0, 1, 1], [], []>} : vector<16x32xbf16>, vector<32x128xbf16>, vector<16x128xf32> -> vector<16x128xf32>
    %c0_i32_5 = arith.constant 0 : i32
    %8 = arith.cmpi eq, %arg1, %c0_i32_5 : i32
    %9 = arith.extui %8 : i1 to i32
    %c0_i32_6 = arith.constant 0 : i32
    %10 = arith.cmpi ne, %9, %c0_i32_6 : i32
    scf.if %10 {
      %c0_11 = arith.constant 0 : index
      %c0_12 = arith.constant 0 : index
      %19 = vector.load %arg6[%c0_11, %c0_12] : memref<16x1xf32, #tpu.memory_space<vmem>>, vector<16x1xf32>
      %cst_13 = arith.constant dense<0xFF800000> : vector<16xf32>
      %20 = vector.multi_reduction <maximumf>, %7, %cst_13 [1] : vector<16x128xf32> to vector<16xf32>
      %21 = vector.shape_cast %20 : vector<16xf32> to vector<16x1xf32>
      %22 = arith.maximumf %19, %21 : vector<16x1xf32>
      %c0_14 = arith.constant 0 : index
      %c0_15 = arith.constant 0 : index
      %23 = vector.load %arg7[%c0_14, %c0_15] : memref<16x1xf32, #tpu.memory_space<vmem>>, vector<16x1xf32>
      %24 = arith.subf %19, %22 : vector<16x1xf32>
      %25 = math.exp %24 : vector<16x1xf32>
      %26 = arith.mulf %23, %25 : vector<16x1xf32>
      %27 = vector.broadcast %22 : vector<16x1xf32> to vector<16x128xf32>
      %28 = arith.subf %7, %27 : vector<16x128xf32>
      %29 = math.exp %28 : vector<16x128xf32>
      %cst_16 = arith.constant dense<0.000000e+00> : vector<16xf32>
      %30 = vector.multi_reduction <add>, %29, %cst_16 [1] : vector<16x128xf32> to vector<16xf32>
      %31 = vector.shape_cast %30 : vector<16xf32> to vector<16x1xf32>
      %32 = arith.addf %26, %31 : vector<16x1xf32>
      %c0_17 = arith.constant 0 : index
      %c0_18 = arith.constant 0 : index
      %33 = vector.load %arg7[%c0_17, %c0_18] : memref<16x1xf32, #tpu.memory_space<vmem>>, vector<16x1xf32>
      tpu.vector_store %arg7[%c0_17, %c0_18], %32 {strides = array<i32>} : memref<16x1xf32, #tpu.memory_space<vmem>>, vector<16x1xf32>,
      %c0_19 = arith.constant 0 : index
      %c0_20 = arith.constant 0 : index
      %34 = vector.load %arg6[%c0_19, %c0_20] : memref<16x1xf32, #tpu.memory_space<vmem>>, vector<16x1xf32>
      tpu.vector_store %arg6[%c0_19, %c0_20], %22 {strides = array<i32>} : memref<16x1xf32, #tpu.memory_space<vmem>>, vector<16x1xf32>,
    } else {
    }
    %c0_i32_7 = arith.constant 0 : i32
    %11 = arith.cmpi eq, %arg1, %c0_i32_7 : i32
    %c0_i32_8 = arith.constant 0 : i32
    %12 = arith.cmpi eq, %arg2, %c0_i32_8 : i32
    %13 = arith.andi %11, %12 : i1
    %14 = arith.extui %13 : i1 to i32
    %c0_i32_9 = arith.constant 0 : i32
    %15 = arith.cmpi ne, %14, %c0_i32_9 : i32
    scf.if %15 {
      %c0_11 = arith.constant 0 : index
      %c0_12 = arith.constant 0 : index
      %19 = vector.load %arg6[%c0_11, %c0_12] : memref<16x1xf32, #tpu.memory_space<vmem>>, vector<16x1xf32>
      %c0_13 = arith.constant 0 : index
      %c0_14 = arith.constant 0 : index
      %20 = vector.load %arg7[%c0_13, %c0_14] : memref<16x1xf32, #tpu.memory_space<vmem>>, vector<16x1xf32>
      %21 = math.log %20 : vector<16x1xf32>
      %22 = arith.addf %19, %21 : vector<16x1xf32>
      %c0_15 = arith.constant 0 : index
      %c0_16 = arith.constant 0 : index
      %23 = vector.load %arg6[%c0_15, %c0_16] : memref<16x1xf32, #tpu.memory_space<vmem>>, vector<16x1xf32>
      tpu.vector_store %arg6[%c0_15, %c0_16], %22 {strides = array<i32>} : memref<16x1xf32, #tpu.memory_space<vmem>>, vector<16x1xf32>,
    } else {
    }
    %c1_i32 = arith.constant 1 : i32
    %16 = arith.cmpi eq, %arg1, %c1_i32 : i32
    %17 = arith.extui %16 : i1 to i32
    %c0_i32_10 = arith.constant 0 : i32
    %18 = arith.cmpi ne, %17, %c0_i32_10 : i32
    scf.if %18 {
      %c0_11 = arith.constant 0 : index
      %c0_12 = arith.constant 0 : index
      %19 = vector.load %arg6[%c0_11, %c0_12] : memref<16x1xf32, #tpu.memory_space<vmem>>, vector<16x1xf32>
      %20 = vector.broadcast %19 : vector<16x1xf32> to vector<16x128xf32>
      %21 = arith.subf %7, %20 : vector<16x128xf32>
      %22 = arith.truncf %21 : vector<16x128xf32> to vector<16x128xbf16>
      %c0_13 = arith.constant 0 : index
      %c0_14 = arith.constant 0 : index
      %23 = vector.load %arg5[%c0_13, %c0_14] : memref<16x128xbf16, #tpu.memory_space<vmem>>, vector<16x128xbf16>
      tpu.vector_store %arg5[%c0_13, %c0_14], %22 {strides = array<i32>} : memref<16x128xbf16, #tpu.memory_space<vmem>>, vector<16x128xbf16>,
    } else {
    }
    return
  }
  func.func @transform_0(%arg0: i32, %arg1: i32, %arg2: i32) -> (i32, i32) {
    %c0_i32 = arith.constant 0 : i32
    %c0_i32_0 = arith.constant 0 : i32
    return %arg0, %c0_i32 : i32, i32
  }
  func.func @transform_1(%arg0: i32, %arg1: i32, %arg2: i32) -> (i32, i32) {
    %c0_i32 = arith.constant 0 : i32
    %c0_i32_0 = arith.constant 0 : i32
    return %c0_i32, %arg2 : i32, i32
  }
  func.func @transform_2(%arg0: i32, %arg1: i32, %arg2: i32) -> (i32, i32) {
    %0 = arith.muli %arg2, %arg1 : i32
    %c0_i32 = arith.constant 0 : i32
    return %arg0, %0 : i32, i32
  }
}

</mosaic_0001>

<llo_original>
// kernel: tpu_custom_call.1
$region0: #{tpu_custom_call.1}
  #allocation0 [shape = 'u32[]', space=smem, size = 0x4, offset = 0x4, fixed_abs, tag = 'smem constant byte address 0x4 - core index']
  #allocation1 [shape = 'u32[144,128]{1,0:T(1,128)}', space=vmem, size = 0x12000, scoped, tag = 'internal scratch']
  #allocation2 [shape = 'f32[16,1]{1,0:T(8,128)}', space=vmem, size = 0x2000, scoped, tag = 'scratch operand']
  #allocation3 [shape = 'f32[16,1]{1,0:T(8,128)}', space=vmem, size = 0x2000, scoped, tag = 'scratch operand']
  %s0 = inlined_call_operand.hbm [shape: bf16[16,32], index: 0, kind: input, shape index: {}]
  %s1 = inlined_call_operand.hbm [shape: bf16[32,128], index: 1, kind: input, shape index: {}]
  %s2 = inlined_call_operand.hbm [shape: bf16[16,128], index: 2, kind: output, shape index: {}]
  %s3 = sld [smem:[#allocation0]]
  $region65: #{tpu_custom_call.1} parent=0
    _
  %s5 = ssub.s32 1, %s3
  %s6 = scalar_select 0, %s5, %s3
  $region1: #{tpu_custom_call.1} parent=0
    #allocation4 [shape = 'u8[4096]{0}', space=vmem, size = 0x1000, scoped, tag = 'input window, operand 0, single buffered']
    #allocation5 [shape = 's32[2]{0}', space=sflag, size = 0x8, scoped, tag = 'scoped memory for tpu_custom_call.1']
    #allocation6 [shape = 's32[2]{0}', space=sflag, size = 0x8, scoped, tag = 'scoped memory for tpu_custom_call.1']
    #allocation7 [shape = 'u8[8192]{0}', space=vmem, size = 0x2000, scoped, tag = 'input window, operand 1, single buffered']
    #allocation8 [shape = 's32[1]{0}', space=sflag, size = 0x4, scoped, tag = 'scoped memory for tpu_custom_call.1']
    #allocation9 [shape = 'u8[8192]{0}', space=vmem, size = 0x2000, scoped, tag = 'output window, operand 0']
    %7 = vsyncpa [#allocation5], 0
    %8 = vsyncpa [#allocation8], 0
    %9 = vsyncpa [#allocation6], 0
    %s10 = scalar_lea.sflag [#allocation6], 1
    %11 = vsyncpa %s10, 0
    loop: start=0, step=1, limit=4
    $region2: #{tpu_custom_call.1} parent=1 // loop_pre_header
      _
    $region3: #{tpu_custom_call.1} parent=1 // loop_header
      %s13 = sphi 0, %s17
      %p14 = scmp.ge.s32.totalorder %s13, 4
      %s20 = sphi 0, %s39
      %s21 = sphi 0, %s35
      %s22 = sphi 0, %s31
      %s23 = sphi 0, %s20
      %s24 = sphi 0, %s21
      %s25 = sphi 0, %s22
      %s26 = sphi 0, %s23
      %s27 = sphi 0, %s24
      %s28 = sphi 0, %s25
      %s42 = sphi 0, %s44
      %s45 = sphi 0, %s42
      %s46 = sphi 0, %s45
      %s62 = sphi 0, %s46
      %s68 = sphi 0, %s70
      %s71 = sphi 0, %s68
      %s72 = sphi 0, %s71
      %s88 = sphi 0, %s72
      %s98 = sphi 0, %s100
      %s101 = sphi 0, %s98
      %s102 = sphi 0, %s101
      %s118 = sphi 0, %s102
    $region4: #{tpu_custom_call.1} parent=1 // loop_header_branch
      %16 = sbr.rel (%p14) target = $region8
    $region5: #{tpu_custom_call.1} parent=1 // loop_body
      %s18 = ssub.s32 %s13, 1
      %s19 = ssub.s32 %s13, 2
      %s29 = sadd.s32 1, %s22
      %p30 = scmp.ge.s32.totalorder %s29, 1
      %s31 = scalar_select %p30, 0, %s29
      %s32 = sadd.s32 1, %s21
      %s33 = scalar_select %p30, %s32, %s21
      %p34 = scmp.ge.s32.totalorder %s33, 2
      %s35 = scalar_select %p34, 0, %s33
      %s36 = sadd.s32 1, %s20
      %s37 = scalar_select %p34, %s36, %s20
      %p38 = scmp.ge.s32.totalorder %s37, 1
      %s39 = scalar_select %p38, 0, %s37
      %s40 = ssub.s32 %s20, %s39
      %p41 = scmp.eq.s32.totalorder %s40, 0
      %s43 = sadd.s32 %s42, 1
      %s44 = scalar_select %p41, %s42, %s43
      %p47 = pneg %p41
      %p48 = scmp.eq.s32.totalorder %s13, 1
      %p49 = por %p47, %p48
      %p50 = scmp.ne.s32.totalorder %s42, %s45
      %p51 = scmp.eq.s32.totalorder %s13, 0
      %p52 = por %p50, %p51
      %p53 = scmp.ne.s32.totalorder %s42, %s45
      %p54 = scmp.eq.s32.totalorder %s18, 1
      %p55 = por %p53, %p54
      %p56 = scmp.ne.s32.totalorder %s45, %s46
      %p57 = scmp.eq.s32.totalorder %s18, 0
      %p58 = por %p56, %p57
      %p59 = scmp.ne.s32.totalorder %s45, %s46
      %p60 = scmp.eq.s32.totalorder %s19, 1
      %p61 = por %p59, %p60
      %p63 = scmp.ne.s32.totalorder %s46, %s62
      %p64 = scmp.eq.s32.totalorder %s19, 0
      %p65 = por %p63, %p64
      %s66 = ssub.s32 %s22, %s31
      %p67 = scmp.eq.s32.totalorder %s66, 0
      %s69 = sadd.s32 %s68, 1
      %s70 = scalar_select %p67, %s68, %s69
      %p73 = pneg %p67
      %p74 = scmp.eq.s32.totalorder %s13, 1
      %p75 = por %p73, %p74
      %p76 = scmp.ne.s32.totalorder %s68, %s71
      %p77 = scmp.eq.s32.totalorder %s13, 0
      %p78 = por %p76, %p77
      %p79 = scmp.ne.s32.totalorder %s68, %s71
      %p80 = scmp.eq.s32.totalorder %s18, 1
      %p81 = por %p79, %p80
      %p82 = scmp.ne.s32.totalorder %s71, %s72
      %p83 = scmp.eq.s32.totalorder %s18, 0
      %p84 = por %p82, %p83
      %p85 = scmp.ne.s32.totalorder %s71, %s72
      %p86 = scmp.eq.s32.totalorder %s19, 1
      %p87 = por %p85, %p86
      %p89 = scmp.ne.s32.totalorder %s72, %s88
      %p90 = scmp.eq.s32.totalorder %s19, 0
      %p91 = por %p89, %p90
      %s92 = smul.u32 %s22, %s21
      %s93 = smul.u32 %s31, %s35
      %s94 = ssub.s32 %s20, %s39
      %s95 = ssub.s32 %s92, %s93
      %s96 = sor.u32 %s94, %s95
      %p97 = scmp.eq.s32.totalorder %s96, 0
      %s99 = sadd.s32 %s98, 1
      %s100 = scalar_select %p97, %s98, %s99
      %p103 = pneg %p97
      %p104 = scmp.eq.s32.totalorder %s13, 1
      %p105 = por %p103, %p104
      %p106 = scmp.ne.s32.totalorder %s98, %s101
      %p107 = scmp.eq.s32.totalorder %s13, 0
      %p108 = por %p106, %p107
      %p109 = scmp.ne.s32.totalorder %s98, %s101
      %p110 = scmp.eq.s32.totalorder %s18, 1
      %p111 = por %p109, %p110
      %p112 = scmp.ne.s32.totalorder %s101, %s102
      %p113 = scmp.eq.s32.totalorder %s18, 0
      %p114 = por %p112, %p113
      %p115 = scmp.ne.s32.totalorder %s101, %s102
      %p116 = scmp.eq.s32.totalorder %s19, 1
      %p117 = por %p115, %p116
      %p119 = scmp.ne.s32.totalorder %s102, %s118
      %p120 = scmp.eq.s32.totalorder %s19, 0
      %p121 = por %p119, %p120
      %p122 = scmp.le.s32.totalorder 1, %s13
      %p123 = scmp.lt.s32.totalorder %s13, 3
      %p124 = pnand %p122, %p123
      %p125 = pneg %p124
      // Predicated region
      $region9: #{tpu_custom_call.1} parent=5 // pred_check
        _
      $region10: #{tpu_custom_call.1} parent=5 // pred_check_branch
        %127 = sbr.rel (%p124) target = $region12
      $region11: #{tpu_custom_call.1} parent=5 // pred_region
        %s128 = ssub.s32 %s13, 1
        // Predicated region
        $region13: #{tpu_custom_call.1} parent=11 // pred_check
          %p129 = pneg %p58
        $region14: #{tpu_custom_call.1} parent=11 // pred_check_branch
          %131 = sbr.rel (%p129) target = $region16
        $region15: #{tpu_custom_call.1} parent=11 // pred_region
          %s132 = smul.u32 2, %s23
          %s134 = ssub.s32 128, 128
          %135 = vsyncadd [#allocation5], %s134
          %s136 = smul.addr %s132, 64
          %s137 = scalar_lea.hbm %s0, %s136
          %s138 = sshll.u32 [#allocation4], 4
          %s139 = int_to_ptr.vmem [resolvable:$true] %s138
          %144 = dma.hbm_to_vmem [thread:$0]  %s137, 128, %s139, [#allocation5], 64, 64, 4
        $region16: #{tpu_custom_call.1} parent=11 // pred_fallthru
          _
        // Predicated region
        $region17: #{tpu_custom_call.1} parent=11 // pred_check
          %p145 = pneg %p84
        $region18: #{tpu_custom_call.1} parent=11 // pred_check_branch
          %147 = sbr.rel (%p145) target = $region20
        $region19: #{tpu_custom_call.1} parent=11 // pred_region
          %s149 = ssub.s32 256, 256
          %150 = vsyncadd [#allocation8], %s149
          %s151 = smul.addr %s25, 64
          %s152 = scalar_lea.hbm %s1, %s151
          %s153 = sshll.u32 [#allocation7], 4
          %s154 = int_to_ptr.vmem [resolvable:$true] %s153
          %159 = dma.hbm_to_vmem [thread:$0]  %s152, 256, %s154, [#allocation8], 64, 64, 4
        $region20: #{tpu_custom_call.1} parent=11 // pred_fallthru
          _
      $region12: #{tpu_custom_call.1} parent=5 // pred_fallthru
        _
      %p160 = scmp.lt.s32.totalorder %s13, 2
      // Predicated region
      $region21: #{tpu_custom_call.1} parent=5 // pred_check
        %p161 = pneg %p160
      $region22: #{tpu_custom_call.1} parent=5 // pred_check_branch
        %163 = sbr.rel (%p161) target = $region24
      $region23: #{tpu_custom_call.1} parent=5 // pred_region
        _
      $region24: #{tpu_custom_call.1} parent=5 // pred_fallthru
        _
      %p164 = scmp.le.s32.totalorder 1, %s13
      %p165 = scmp.lt.s32.totalorder %s13, 3
      %p166 = pnand %p164, %p165
      %p167 = pneg %p166
      // Predicated region
      $region25: #{tpu_custom_call.1} parent=5 // pred_check
        _
      $region26: #{tpu_custom_call.1} parent=5 // pred_check_branch
        %169 = sbr.rel (%p166) target = $region28
      $region27: #{tpu_custom_call.1} parent=5 // pred_region
        %s170 = ssub.s32 %s13, 1
        // Predicated region
        $region29: #{tpu_custom_call.1} parent=27 // pred_check
          %p171 = pneg %p58
        $region30: #{tpu_custom_call.1} parent=27 // pred_check_branch
          %173 = sbr.rel (%p171) target = $region32
        $region31: #{tpu_custom_call.1} parent=27 // pred_region
          %174 = dma.done [#allocation5], 128
        $region32: #{tpu_custom_call.1} parent=27 // pred_fallthru
          _
        // Predicated region
        $region33: #{tpu_custom_call.1} parent=27 // pred_check
          %p175 = pneg %p84
        $region34: #{tpu_custom_call.1} parent=27 // pred_check_branch
          %177 = sbr.rel (%p175) target = $region36
        $region35: #{tpu_custom_call.1} parent=27 // pred_region
          %178 = dma.done [#allocation8], 256
        $region36: #{tpu_custom_call.1} parent=27 // pred_fallthru
          _
        %p179 = pneg %p58
        %p180 = pneg %p55
        %p181 = pneg %p84
        %p182 = pneg %p81
        %p183 = pneg %p114
        %p184 = pneg %p111
        %s185 = sand.u32 %s101, 1
        %s186 = scalar_lea.sflag [#allocation6], %s185
        %s187 = sand.u32 %s101, 1
        %s188 = smul.addr %s187, 8
        %s189 = scalar_lea.vmem [#allocation9], %s188
        %s190 = smul.u32 2, %s23
        %s191 = smul.u32 %s25, %s24
        %s192 = smul.u32 2, %s23
        %p194 = scmp.eq.s32.totalorder %s24, 0
        %p195 = scmp.eq.s32.totalorder %s25, 0
        %p196 = pnand %p194, %p195
        %p197 = pneg %p196
        // Predicated region
        $region37: #{tpu_custom_call.1} parent=27 // pred_check
          _
        $region38: #{tpu_custom_call.1} parent=27 // pred_check_branch
          %199 = sbr.rel (%p196) target = $region40
        $region39: #{tpu_custom_call.1} parent=27 // pred_region
          %vm200 = vcmask 7168
          %201 = vst.msk [vmem:[#allocation2] sm:$0xff] %vm200, -inf
          %202 = vst.msk [vmem:[#allocation2 + $0x8] sm:$0xff] %vm200, -inf
          %203 = vst.msk [vmem:[#allocation3] sm:$0xff] %vm200, 0.0
          %204 = vst.msk [vmem:[#allocation3 + $0x8] sm:$0xff] %vm200, 0.0
        $region40: #{tpu_custom_call.1} parent=27 // pred_fallthru
          _
        %v205 = vld [vmem:[#allocation4] sm:$0xf]
        %v206 = vld [vmem:[#allocation4 + $0x4] sm:$0xf]
        %v207 = vld [vmem:[#allocation7] sm:$0xf]
        %v208 = vld [vmem:[#allocation7 + $0x4] sm:$0xf]
        %v209 = vld [vmem:[#allocation7 + $0x8] sm:$0xf]
        %v210 = vld [vmem:[#allocation7 + $0xc] sm:$0xf]
        %v213 = vunpack.c.l.b16 %v205
        %v214 = vunpack.c.l.b16 %v206
        %v215 = vpack.c.b16 %v214, %v213
        %v220 = vunpack.c.l.b16 %v207
        %v221 = vunpack.c.l.b16 %v208
        %v222 = vunpack.c.l.b16 %v209
        %v223 = vunpack.c.l.b16 %v210
        %v224 = vpack.c.b16 %v221, %v220
        %v225 = vpack.c.b16 %v223, %v222
        %vm228 = vcmask 261120
        %v230 = vsel %vm228, %v215, 0
        %232 = vmatprep.subr.bf16.mxu0 0
        %233 = vmatpush1.bf16.msra.mxu0 %v224
        %234 = vmatprep.subr.bf16.mxu0 0
        %235 = vmatpush1.bf16.msra.mxu0 %v225
        %236 = vmatprep.subr.bf16.mxu0 0
        %237 = vmatpush1.bf16.msra.mxu0 0
        %238 = vmatprep.subr.bf16.mxu0 0
        %239 = vmatpush1.bf16.msra.mxu0 0
        %240 = vmatprep.subr.bf16.mxu0 0
        %241 = vmatpush1.bf16.msra.mxu0 0
        %242 = vmatprep.subr.bf16.mxu0 0
        %243 = vmatpush1.bf16.msra.mxu0 0
        %244 = vmatprep.subr.bf16.mxu0 0
        %245 = vmatpush1.bf16.msra.mxu0 0
        %246 = vmatprep.subr.bf16.mxu0 0
        %247 = vmatpush1.bf16.msra.mxu0 0
        %248 = vmatprep.subr.bf16.mxu0 0
        %249 = vmatpush1.bf16.msra.mxu0 0
        %250 = vmatprep.subr.bf16.mxu0 0
        %251 = vmatpush1.bf16.msra.mxu0 0
        %252 = vmatprep.subr.bf16.mxu0 0
        %253 = vmatpush1.bf16.msra.mxu0 0
        %254 = vmatprep.subr.bf16.mxu0 0
        %255 = vmatpush1.bf16.msra.mxu0 0
        %256 = vmatprep.subr.bf16.mxu0 0
        %257 = vmatpush1.bf16.msra.mxu0 0
        %258 = vmatprep.subr.bf16.mxu0 0
        %259 = vmatpush1.bf16.msra.mxu0 0
        %260 = vmatprep.subr.bf16.mxu0 0
        %261 = vmatpush1.bf16.msra.mxu0 0
        %262 = vmatprep.subr.bf16.mxu0 0
        %263 = vmatpush1.bf16.msra.mxu0 0
        %264 = vmatprep.mubr.bf16.mxu0 0
        %265 = vmatmul.mubr.bf16.gmra.mrb[0].mxu0 %v230
        %v266 = vpop.f32.mrb[0].mxu0
        %v267 = vadd.f32 0.0, %v266
        %v268 = vpop.f32.mrb[0].mxu0
        %v269 = vpop.f32.mrb[0].mxu0
        %v270 = vadd.f32 0.0, %v269
        %v271 = vpop.f32.mrb[0].mxu0
        %272 = vdwg.mxu0
        // Predicated region
        $region41: #{tpu_custom_call.1} parent=27 // pred_check
          %p273 = pneg %p194
        $region42: #{tpu_custom_call.1} parent=27 // pred_check_branch
          %275 = sbr.rel (%p273) target = $region44
        $region43: #{tpu_custom_call.1} parent=27 // pred_region
          %v276 = vld [vmem:[#allocation2] sm:$0xff]
          %v277 = vld [vmem:[#allocation2 + $0x8] sm:$0xff]
          %278 = vmax.xlane.f32.xlu0 %v267
          %v279 = vpop.xlane.xlu0 %278
          %280 = vmax.xlane.f32.xlu0 %v270
          %v281 = vpop.xlane.xlu0 %280
          %v282 = vmax.f32 %v276, %v279
          %v283 = vmax.f32 %v277, %v281
          %v284 = vld [vmem:[#allocation3] sm:$0xff]
          %v285 = vld [vmem:[#allocation3 + $0x8] sm:$0xff]
          %v286 = vsub.f32 %v276, %v282
          %v287 = vsub.f32 %v277, %v283
          %v288 = vmul.f32 %v286, 1.442695
          %v289 = vpow.pop %v288
          %v290 = vmul.f32 %v287, 1.442695
          %v291 = vpow.pop %v290
          %v292 = vmul.f32 %v284, %v289
          %v293 = vmul.f32 %v285, %v291
          %295 = vset.pattern.permute.xlu0 0
          %296 = vperm.xlu0 %295, %v282
          %v297 = vpop.permute.xlu0 %296
          %300 = vset.pattern.permute.xlu0 0
          %301 = vperm.xlu0 %300, %v283
          %v302 = vpop.permute.xlu0 %301
          %v304 = vsub.f32 %v267, %v297
          %v305 = vsub.f32 %v270, %v302
          %v306 = vmul.f32 %v304, 1.442695
          %v307 = vpow.pop %v306
          %v308 = vmul.f32 %v305, 1.442695
          %v309 = vpow.pop %v308
          %310 = vadd.xlane.f32.xlu0 %v307
          %v311 = vpop.xlane.xlu0 %310
          %312 = vadd.xlane.f32.xlu0 %v309
          %v313 = vpop.xlane.xlu0 %312
          %v314 = vadd.f32 %v292, %v311
          %v315 = vadd.f32 %v293, %v313
          %vm316 = vcmask 7168
          %317 = vst.msk [vmem:[#allocation3] sm:$0xff] %vm316, %v314
          %318 = vst.msk [vmem:[#allocation3 + $0x8] sm:$0xff] %vm316, %v315
          %319 = vst.msk [vmem:[#allocation2] sm:$0xff] %vm316, %v282
          %320 = vst.msk [vmem:[#allocation2 + $0x8] sm:$0xff] %vm316, %v283
        $region44: #{tpu_custom_call.1} parent=27 // pred_fallthru
          _
        // Predicated region
        $region45: #{tpu_custom_call.1} parent=27 // pred_check
          _
        $region46: #{tpu_custom_call.1} parent=27 // pred_check_branch
          %322 = sbr.rel (%p196) target = $region48
        $region47: #{tpu_custom_call.1} parent=27 // pred_region
          %v323 = vld [vmem:[#allocation2] sm:$0xff]
          %v324 = vld [vmem:[#allocation2 + $0x8] sm:$0xff]
          %v325 = vld [vmem:[#allocation3] sm:$0xff]
          %v326 = vld [vmem:[#allocation3 + $0x8] sm:$0xff]
          %v327 = vlog2.pop %v325
          %v328 = vmul.f32 %v327, 0.6931472
          %v329 = vlog2.pop %v326
          %v330 = vmul.f32 %v329, 0.6931472
          %v331 = vadd.f32 %v323, %v328
          %v332 = vadd.f32 %v324, %v330
          %vm333 = vcmask 7168
          %334 = vst.msk [vmem:[#allocation2] sm:$0xff] %vm333, %v331
          %335 = vst.msk [vmem:[#allocation2 + $0x8] sm:$0xff] %vm333, %v332
        $region48: #{tpu_custom_call.1} parent=27 // pred_fallthru
          _
        %p336 = scmp.eq.s32.totalorder %s24, 1
        // Predicated region
        $region49: #{tpu_custom_call.1} parent=27 // pred_check
          %p337 = pneg %p336
        $region50: #{tpu_custom_call.1} parent=27 // pred_check_branch
          %339 = sbr.rel (%p337) target = $region52
        $region51: #{tpu_custom_call.1} parent=27 // pred_region
          %v340 = vld [vmem:[#allocation2] sm:$0xff]
          %v341 = vld [vmem:[#allocation2 + $0x8] sm:$0xff]
          %343 = vset.pattern.permute.xlu0 0
          %344 = vperm.xlu0 %343, %v340
          %v345 = vpop.permute.xlu0 %344
          %348 = vset.pattern.permute.xlu0 0
          %349 = vperm.xlu0 %348, %v341
          %v350 = vpop.permute.xlu0 %349
          %v352 = vsub.f32 %v267, %v345
          %v353 = vsub.f32 %v270, %v350
          %v354 = vpack.c.bf16 %v353, %v352
          %v356 = vunpack.c.l.b16 %v354
          %v357 = vunpack.c.h.b16 %v354
          %v358 = vpack.c.b16 %v356, %v356
          %v359 = vpack.c.b16 %v357, %v357
          %362 = vst [vmem:[%s189] sm:$0xf] %v358
          %363 = vst [vmem:[%s189 + $0x4] sm:$0xf] %v359
        $region52: #{tpu_custom_call.1} parent=27 // pred_fallthru
          _
        %s364 = sand.u32 %s101, 1
        %s365 = scalar_lea.sflag [#allocation6], %s364
        %s366 = sand.u32 %s101, 1
        %s367 = smul.addr %s366, 8
        %s368 = scalar_lea.vmem [#allocation9], %s367
        // Predicated region
        $region53: #{tpu_custom_call.1} parent=27 // pred_check
          %p369 = pneg %p111
        $region54: #{tpu_custom_call.1} parent=27 // pred_check_branch
          %371 = sbr.rel (%p369) target = $region56
        $region55: #{tpu_custom_call.1} parent=27 // pred_region
          %s372 = smul.u32 %s25, %s24
          %s373 = smul.u32 2, %s23
          %s375 = ssub.s32 128, 128
          %376 = vsyncadd %s365, %s375
          %s377 = sadd.s32 %s372, %s373
          %s378 = smul.addr %s377, 64
          %s379 = scalar_lea.hbm %s2, %s378
          %s380 = sshll.u32 %s368, 4
          %s381 = int_to_ptr.vmem [resolvable:$true] %s380
          %386 = dma.vmem_to_hbm [thread:$0]  %s381, 128, %s379, %s365, 64, 64, 4
        $region56: #{tpu_custom_call.1} parent=27 // pred_fallthru
          _
      $region28: #{tpu_custom_call.1} parent=5 // pred_fallthru
        _
      %p387 = scmp.le.s32.totalorder 2, %s13
      // Predicated region
      $region57: #{tpu_custom_call.1} parent=5 // pred_check
        %p388 = pneg %p387
      $region58: #{tpu_custom_call.1} parent=5 // pred_check_branch
        %390 = sbr.rel (%p388) target = $region60
      $region59: #{tpu_custom_call.1} parent=5 // pred_region
        %s391 = ssub.s32 %s13, 2
        // Predicated region
        $region61: #{tpu_custom_call.1} parent=59 // pred_check
          %p392 = pneg %p117
        $region62: #{tpu_custom_call.1} parent=59 // pred_check_branch
          %394 = sbr.rel (%p392) target = $region64
        $region63: #{tpu_custom_call.1} parent=59 // pred_region
          %s395 = sand.u32 %s102, 1
          %s396 = scalar_lea.sflag [#allocation6], %s395
          %s397 = sand.u32 %s102, 1
          %s398 = smul.addr %s397, 8
          %s399 = scalar_lea.vmem [#allocation9], %s398
          %400 = dma.done %s396, 128
        $region64: #{tpu_custom_call.1} parent=59 // pred_fallthru
          _
      $region60: #{tpu_custom_call.1} parent=5 // pred_fallthru
        _
    $region6: #{tpu_custom_call.1} parent=1 // loop_footer
      %s17 = sadd.s32 1, %s13
    $region7: #{tpu_custom_call.1} parent=1 // loop_footer_branch
      %12 = sbr.rel target = $region3
    $region8: #{tpu_custom_call.1} parent=1 // loop_exit
      _
    %401 = vsyncpa [#allocation5], 1
    %s402 = scalar_lea.sflag [#allocation5], 1
    %403 = vsyncpa %s402, 1
    %404 = vsyncpa [#allocation8], 1
    %405 = vsyncpa [#allocation6], 1
    %s406 = scalar_lea.sflag [#allocation6], 1
    %407 = vsyncpa %s406, 1

</llo_original>
